<compile_context>
chip_gen: v5e
topology: v5e:2x2
jax: 0.10.0
libtpu: 0.0.40
codegen_flags: <defaults>
</compile_context>

<pallas_src>
import jax
import jax.numpy as jnp
from jax.experimental import pallas as pl
from jax.experimental.pallas import tpu as pltpu


# ----------------------------------------------------------------------------
# Fused Pallas kernel: both MLP heads in one pass.
#   h = relu(x @ W1cat + b1cat)          (BN already folded into W1/b1)
#   o = h @ W2blockdiag + b2cat          (block-diagonal -> heads stay independent)
# ----------------------------------------------------------------------------
def fused_uhead_kernel(x_ref, w1_ref, b1_ref, w2_ref, b2_ref, o_ref):
    # fc1 on the MXU: bf16 inputs, f32 accumulation.
    x_bf16 = x_ref[...].astype(jnp.bfloat16)
    h = jnp.dot(x_bf16, w1_ref[...], preferred_element_type=jnp.float32)
    # bias + ReLU in f32 on the VPU.
    h = jnp.maximum(h + b1_ref[...], 0.0)
    # fc2 (block-diagonal across the two heads) on the MXU.
    o = jnp.dot(h.astype(jnp.bfloat16), w2_ref[...], preferred_element_type=jnp.float32)
    o_ref[...] = o + b2_ref[...]


def fused_uhead_pallas(x, fp):
    """Run the fused UHead. x: (B, C) float32; fp: fused parameter dict."""
    B = x.shape[0]
    C, H = fp["w1"].shape
    O = fp["w2"].shape[1]

    flops = 2 * B * (C * H + H * O)
    bytes_accessed = int(
        x.size * x.dtype.itemsize
        + sum(int(fp[k].size) * fp[k].dtype.itemsize for k in ("w1", "b1", "w2", "b2"))
        + B * O * 4
    )

    vmem = pl.BlockSpec(memory_space=pltpu.MemorySpace.VMEM)
    return pl.pallas_call(
        fused_uhead_kernel,
        out_shape=jax.ShapeDtypeStruct((B, O), jnp.float32),
        in_specs=[vmem] * 5,
        out_specs=vmem,
        cost_estimate=pl.CostEstimate(
            flops=flops, transcendentals=0, bytes_accessed=bytes_accessed
        ),
    )(x, fp["w1"], fp["b1"], fp["w2"], fp["b2"])


# ----------------------------------------------------------------------------
# Parameter construction (deterministic He init, eval-mode BN stats).
# ----------------------------------------------------------------------------
def make_mlp_head_raw(key, in_channels, mlp_factor, out_channels, use_bn=True, eps=1e-5):
    hidden = int(round(in_channels * mlp_factor))
    k1, k2 = jax.random.split(key)
    w1 = jax.random.normal(k1, (in_channels, hidden), jnp.float32) * jnp.sqrt(2.0 / in_channels)
    b1 = jnp.zeros((hidden,), jnp.float32)
    w2 = jax.random.normal(k2, (hidden, out_channels), jnp.float32) * jnp.sqrt(2.0 / hidden)
    b2 = jnp.zeros((out_channels,), jnp.float32)
    if use_bn:
        # eval-mode BatchNorm1d with default stats: gamma=1, beta=0, mean=0, var=1
        gamma = jnp.ones((hidden,), jnp.float32)
        beta = jnp.zeros((hidden,), jnp.float32)
        running_mean = jnp.zeros((hidden,), jnp.float32)
        running_var = jnp.ones((hidden,), jnp.float32)
        scale = gamma / jnp.sqrt(running_var + eps)
        shift = beta - running_mean * scale
    else:
        scale = jnp.ones((hidden,), jnp.float32)
        shift = jnp.zeros((hidden,), jnp.float32)
    return {"w1": w1, "b1": b1, "scale": scale, "shift": shift, "w2": w2, "b2": b2}


def _fold_bn(p):
    # Fold eval-mode BN into fc1:  w1' = w1 * scale ; b1' = b1 * scale + shift
    w1f = p["w1"] * p["scale"][None, :]
    b1f = p["b1"] * p["scale"] + p["shift"]
    return w1f, b1f, p["w2"], p["b2"]


def fuse_uhead_params(label_p, noise_p=None):
    """Fold BN and fuse label/noise heads into one set of kernel params."""
    parts = [_fold_bn(label_p)]
    if noise_p is not None:
        parts.append(_fold_bn(noise_p))

    hiddens = [p[0].shape[1] for p in parts]
    outs = [p[2].shape[1] for p in parts]
    H, O = sum(hiddens), sum(outs)

    w1 = jnp.concatenate([p[0] for p in parts], axis=1)            # (C, H)
    b1 = jnp.concatenate([p[1] for p in parts], axis=0)[None, :]   # (1, H)
    b2 = jnp.concatenate([p[3] for p in parts], axis=0)[None, :]   # (1, O)

    # Block-diagonal W2 keeps the two heads mathematically independent.
    w2 = jnp.zeros((H, O), jnp.float32)
    hoff = ooff = 0
    for (_, _, w2_i, _), h_i, o_i in zip(parts, hiddens, outs):
        w2 = w2.at[hoff:hoff + h_i, ooff:ooff + o_i].set(w2_i)
        hoff += h_i
        ooff += o_i

    return {
        "w1": w1.astype(jnp.bfloat16),   # bf16 MXU weights (halves weight DMA)
        "b1": b1,                        # biases stay f32 (VPU math in f32)
        "w2": w2.astype(jnp.bfloat16),
        "b2": b2,
        "out_splits": tuple(outs),
    }


# ----------------------------------------------------------------------------
# UHead forward: one Pallas call, slicing done outside the kernel.
# ----------------------------------------------------------------------------
def uhead_forward(x, fused_params):
    out = fused_uhead_pallas(x, fused_params)
    splits = fused_params["out_splits"]
    ret = {"logits": out[:, : splits[0]], "feature_embeddings": x}
    if len(splits) > 1:
        ret["noise_probs"] = out[:, splits[0] : splits[0] + splits[1]]
    return ret


# ----------------------------------------------------------------------------
# References for correctness checks.
# ----------------------------------------------------------------------------
def mlp_head_ref_bf16(x, p):
    """Same math as the kernel (bf16 MXU inputs, f32 accumulate, BN folded)."""
    w1f, b1f, w2, b2 = _fold_bn(p)
    h = jnp.dot(x.astype(jnp.bfloat16), w1f.astype(jnp.bfloat16),
                preferred_element_type=jnp.float32) + b1f[None, :]
    h = jnp.maximum(h, 0.0)
    return jnp.dot(h.astype(jnp.bfloat16), w2.astype(jnp.bfloat16),
                   preferred_element_type=jnp.float32) + b2[None, :]


def mlp_head_ref_f32(x, p):
    """Pure-f32 reference of the original (unfolded) module math."""
    h = x @ p["w1"] + p["b1"][None, :]
    h = h * p["scale"][None, :] + p["shift"][None, :]
    h = jnp.maximum(h, 0.0)
    return h @ p["w2"] + p["b2"][None, :]


if __name__ == "__main__":
    # Small shapes: batch=8, in_channels=32; lpn_head='mlp-2.0' (hidden=64, out=4);
    # npn_head={'mlp_factor': 1.0, 'num_types': 3} (hidden=32, out=3).
    B, IN_CH, OUT_CH = 8, 32, 4
    key = jax.random.PRNGKey(0)
    kx, kl, kn = jax.random.split(key, 3)

    x = jax.random.normal(kx, (B, IN_CH), jnp.float32)
    label_raw = make_mlp_head_raw(kl, IN_CH, mlp_factor=2.0, out_channels=OUT_CH)
    noise_raw = make_mlp_head_raw(kn, IN_CH, mlp_factor=1.0, out_channels=3)
    fused = fuse_uhead_params(label_raw, noise_raw)

    result = uhead_forward(x, fused)
    jax.block_until_ready(result)

    # 1) check against a reference that does the same bf16-input / f32-accumulate math
    ref_logits_b = mlp_head_ref_bf16(x, label_raw)
    ref_noise_b = mlp_head_ref_bf16(x, noise_raw)
    assert jnp.allclose(result["logits"], ref_logits_b, atol=1e-3, rtol=1e-3)
    assert jnp.allclose(result["noise_probs"], ref_noise_b, atol=1e-3, rtol=1e-3)

    # 2) sanity check against the pure-f32 original module math (loose tol for bf16 MXU inputs)
    ref_logits_f = mlp_head_ref_f32(x, label_raw)
    ref_noise_f = mlp_head_ref_f32(x, noise_raw)
    assert jnp.allclose(result["logits"], ref_logits_f, atol=5e-2, rtol=5e-2)
    assert jnp.allclose(result["noise_probs"], ref_noise_f, atol=5e-2, rtol=5e-2)

    assert jnp.array_equal(result["feature_embeddings"], x)
    assert result["logits"].shape == (B, OUT_CH)
    assert result["noise_probs"].shape == (B, 3)

    print("KERNEL_OK")
</pallas_src>

<mosaic_0001>
module attributes {stable_mosaic.version = 11 : i64} {
  func.func @fused_uhead_kernel(%arg0: memref<8x32xf32, #tpu.memory_space<vmem>>, %arg1: memref<32x96xbf16, #tpu.memory_space<vmem>>, %arg2: memref<1x96xf32, #tpu.memory_space<vmem>>, %arg3: memref<96x7xbf16, #tpu.memory_space<vmem>>, %arg4: memref<1x7xf32, #tpu.memory_space<vmem>>, %arg5: memref<8x7xf32, #tpu.memory_space<vmem>>) attributes {dimension_semantics = [], scalar_prefetch = 0 : i64, scratch_operands = 0 : i64, tpu.core_type = #tpu.core_type<tc>} {
    %c0 = arith.constant 0 : index
    %c0_0 = arith.constant 0 : index
    %0 = vector.load %arg0[%c0, %c0_0] : memref<8x32xf32, #tpu.memory_space<vmem>>, vector<8x32xf32>
    %1 = arith.truncf %0 : vector<8x32xf32> to vector<8x32xbf16>
    %c0_1 = arith.constant 0 : index
    %c0_2 = arith.constant 0 : index
    %2 = vector.load %arg1[%c0_1, %c0_2] : memref<32x96xbf16, #tpu.memory_space<vmem>>, vector<32x96xbf16>
    %cst = arith.constant dense<0.000000e+00> : vector<8x96xf32>
    %3 = tpu.matmul %1, %2, %cst {dimension_numbers = #tpu.dot_dimension_numbers<[1], [0], [0], [1], [0, 0, 1, 1], [], []>} : vector<8x32xbf16>, vector<32x96xbf16>, vector<8x96xf32> -> vector<8x96xf32>
    %c0_3 = arith.constant 0 : index
    %c0_4 = arith.constant 0 : index
    %4 = vector.load %arg2[%c0_3, %c0_4] : memref<1x96xf32, #tpu.memory_space<vmem>>, vector<1x96xf32>
    %5 = vector.broadcast %4 : vector<1x96xf32> to vector<8x96xf32>
    %6 = arith.addf %3, %5 : vector<8x96xf32>
    %cst_5 = arith.constant 0.000000e+00 : f32
    %7 = vector.broadcast %cst_5 : f32 to vector<8x96xf32>
    %8 = arith.maximumf %6, %7 : vector<8x96xf32>
    %9 = arith.truncf %8 : vector<8x96xf32> to vector<8x96xbf16>
    %c0_6 = arith.constant 0 : index
    %c0_7 = arith.constant 0 : index
    %10 = vector.load %arg3[%c0_6, %c0_7] : memref<96x7xbf16, #tpu.memory_space<vmem>>, vector<96x7xbf16>
    %cst_8 = arith.constant dense<0.000000e+00> : vector<8x7xf32>
    %11 = tpu.matmul %9, %10, %cst_8 {dimension_numbers = #tpu.dot_dimension_numbers<[1], [0], [0], [1], [0, 0, 1, 1], [], []>} : vector<8x96xbf16>, vector<96x7xbf16>, vector<8x7xf32> -> vector<8x7xf32>
    %c0_9 = arith.constant 0 : index
    %c0_10 = arith.constant 0 : index
    %12 = vector.load %arg4[%c0_9, %c0_10] : memref<1x7xf32, #tpu.memory_space<vmem>>, vector<1x7xf32>
    %13 = vector.broadcast %12 : vector<1x7xf32> to vector<8x7xf32>
    %14 = arith.addf %11, %13 : vector<8x7xf32>
    %c0_11 = arith.constant 0 : index
    %c0_12 = arith.constant 0 : index
    %15 = vector.load %arg5[%c0_11, %c0_12] : memref<8x7xf32, #tpu.memory_space<vmem>>, vector<8x7xf32>
    tpu.vector_store %arg5[%c0_11, %c0_12], %14 {strides = array<i32>} : memref<8x7xf32, #tpu.memory_space<vmem>>, vector<8x7xf32>,
    return
  }
}

</mosaic_0001>

<llo_original>
// kernel: tpu_custom_call.1
$region0: #{tpu_custom_call.1}
  #allocation0 [shape = 'u32[]', space=smem, size = 0x4, offset = 0x4, fixed_abs, tag = 'smem constant byte address 0x4 - core index']
  #allocation1 [shape = 'u32[72,128]{1,0:T(1,128)}', space=vmem, size = 0x9000, scoped, tag = 'internal scratch']
  %s0 = inlined_call_operand.vmem [shape: f32[8,32], index: 0, kind: input, shape index: {}]
  %s1 = inlined_call_operand.vmem [shape: bf16[32,96], index: 1, kind: input, shape index: {}]
  %s2 = inlined_call_operand.vmem [shape: f32[1,96], index: 2, kind: input, shape index: {}]
  %s3 = inlined_call_operand.vmem [shape: bf16[96,7], index: 3, kind: input, shape index: {}]
  %s4 = inlined_call_operand.vmem [shape: f32[1,7], index: 4, kind: input, shape index: {}]
  %s5 = inlined_call_operand.hbm [shape: f32[8,7], index: 5, kind: output, shape index: {}]
  %s6 = sld [smem:[#allocation0]]
  $region30: #{tpu_custom_call.1} parent=0
    _
  %s8 = ssub.s32 1, %s6
  %s9 = scalar_select 0, %s8, %s6
  $region1: #{tpu_custom_call.1} parent=0
    #allocation2 [shape = 'u8[4096]{0}', space=vmem, size = 0x1000, scoped, tag = 'output window, operand 0, single buffered']
    #allocation3 [shape = 's32[1]{0}', space=sflag, size = 0x4, scoped, tag = 'scoped memory for tpu_custom_call.1']
    %10 = vsyncpa [#allocation3], 0
    // Predicated region
    $region2: #{tpu_custom_call.1} parent=1 // pred_check
      _
    $region3: #{tpu_custom_call.1} parent=1 // pred_check_branch
      %12 = sbr.rel (0) target = $region5
    $region4: #{tpu_custom_call.1} parent=1 // pred_region
      _
    $region5: #{tpu_custom_call.1} parent=1 // pred_fallthru
      _
    // Predicated region
    $region6: #{tpu_custom_call.1} parent=1 // pred_check
      _
    $region7: #{tpu_custom_call.1} parent=1 // pred_check_branch
      %14 = sbr.rel (0) target = $region9
    $region8: #{tpu_custom_call.1} parent=1 // pred_region
      _
    $region9: #{tpu_custom_call.1} parent=1 // pred_fallthru
      _
    // Predicated region
    $region10: #{tpu_custom_call.1} parent=1 // pred_check
      _
    $region11: #{tpu_custom_call.1} parent=1 // pred_check_branch
      %16 = sbr.rel (0) target = $region13
    $region12: #{tpu_custom_call.1} parent=1 // pred_region
      _
    $region13: #{tpu_custom_call.1} parent=1 // pred_fallthru
      _
    // Predicated region
    $region14: #{tpu_custom_call.1} parent=1 // pred_check
      _
    $region15: #{tpu_custom_call.1} parent=1 // pred_check_branch
      %18 = sbr.rel (0) target = $region17
    $region16: #{tpu_custom_call.1} parent=1 // pred_region
      _
    $region17: #{tpu_custom_call.1} parent=1 // pred_fallthru
      _
    // Predicated region
    $region18: #{tpu_custom_call.1} parent=1 // pred_check
      _
    $region19: #{tpu_custom_call.1} parent=1 // pred_check_branch
      %20 = sbr.rel (0) target = $region21
    $region20: #{tpu_custom_call.1} parent=1 // pred_region
      _
    $region21: #{tpu_custom_call.1} parent=1 // pred_fallthru
      _
    %v22 = vld [vmem:[%s0] sm:$0xff]
    %v23 = vpack.c.bf16 %v22, %v22
    %v24 = vld [vmem:[%s1] sm:$0xf]
    %v25 = vld [vmem:[%s1 + $0x4] sm:$0xf]
    %v26 = vld [vmem:[%s1 + $0x8] sm:$0xf]
    %v27 = vld [vmem:[%s1 + $0xc] sm:$0xf]
    %v28 = vld [vmem:[%s2] sm:$0x1]
    %v30 = vperm.slane %v28, 0
    %v36 = vunpack.c.l.b16 %v24
    %v37 = vunpack.c.l.b16 %v25
    %v38 = vunpack.c.l.b16 %v26
    %v39 = vunpack.c.l.b16 %v27
    %v40 = vpack.c.b16 %v37, %v36
    %v41 = vpack.c.b16 %v39, %v38
    %vm44 = vcmask 261120
    %v46 = vsel %vm44, %v23, 0
    %48 = vmatpush.bf16.msra.mxu0 0
    %49 = vmatpush.bf16.msra.mxu0 0
    %50 = vmatpush.bf16.msra.mxu0 0
    %51 = vmatpush.bf16.msra.mxu0 0
    %52 = vmatpush.bf16.msra.mxu0 0
    %53 = vmatpush.bf16.msra.mxu0 0
    %54 = vmatpush.bf16.msra.mxu0 %v41
    %55 = vmatpush.bf16.msra.mxu0 %v40
    %56 = vmatmul.bf16.gmra.mxu0 %v46
    %v57 = vpop.f32.mrf.mxu0
    %v58 = vadd.f32 %v30, %v57
    %v59 = vpop.f32.mrf.mxu0
    %60 = vdwg.mxu0
    %v61 = vmax.f32 %v58, 0.0
    %v62 = vpack.c.bf16 %v61, %v61
    %v63 = vld [vmem:[%s3] sm:$0xf]
    %v64 = vld [vmem:[%s3 + $0x4] sm:$0xf]
    %v65 = vld [vmem:[%s3 + $0x8] sm:$0xf]
    %v66 = vld [vmem:[%s3 + $0xc] sm:$0xf]
    %v67 = vld [vmem:[%s3 + $0x10] sm:$0xf]
    %v68 = vld [vmem:[%s3 + $0x14] sm:$0xf]
    %v69 = vld [vmem:[%s3 + $0x18] sm:$0xf]
    %v70 = vld [vmem:[%s3 + $0x1c] sm:$0xf]
    %v71 = vld [vmem:[%s3 + $0x20] sm:$0xf]
    %v72 = vld [vmem:[%s3 + $0x24] sm:$0xf]
    %v73 = vld [vmem:[%s3 + $0x28] sm:$0xf]
    %v74 = vld [vmem:[%s3 + $0x2c] sm:$0xf]
    %v75 = vld [vmem:[%s4] sm:$0x1]
    %v77 = vperm.slane %v75, 0
    %v91 = vunpack.c.l.b16 %v63
    %v92 = vunpack.c.l.b16 %v64
    %v93 = vunpack.c.l.b16 %v65
    %v94 = vunpack.c.l.b16 %v66
    %v95 = vunpack.c.l.b16 %v67
    %v96 = vunpack.c.l.b16 %v68
    %v97 = vunpack.c.l.b16 %v69
    %v98 = vunpack.c.l.b16 %v70
    %v99 = vunpack.c.l.b16 %v71
    %v100 = vunpack.c.l.b16 %v72
    %v101 = vunpack.c.l.b16 %v73
    %v102 = vunpack.c.l.b16 %v74
    %v103 = vpack.c.b16 %v92, %v91
    %v104 = vpack.c.b16 %v94, %v93
    %v105 = vpack.c.b16 %v96, %v95
    %v106 = vpack.c.b16 %v98, %v97
    %v107 = vpack.c.b16 %v100, %v99
    %v108 = vpack.c.b16 %v102, %v101
    %vm115 = vcmask 785408
    %v117 = vsel %vm115, %v62, 0
    %119 = vmatpush.bf16.msra.mxu0 0
    %120 = vmatpush.bf16.msra.mxu0 0
    %121 = vmatpush.bf16.msra.mxu0 %v108
    %122 = vmatpush.bf16.msra.mxu0 %v107
    %123 = vmatpush.bf16.msra.mxu0 %v106
    %124 = vmatpush.bf16.msra.mxu0 %v105
    %125 = vmatpush.bf16.msra.mxu0 %v104
    %126 = vmatpush.bf16.msra.mxu0 %v103
    %127 = vmatmul.bf16.gmra.mxu0 %v117
    %v128 = vpop.f32.mrf.mxu0
    %v129 = vadd.f32 %v77, %v128
    %v130 = vpop.f32.mrf.mxu0
    %131 = vdwg.mxu0
    %vm132 = vcmask 56320
    %133 = vst.msk [vmem:[#allocation2] sm:$0xff] %vm132, %v129
    // Predicated region
    $region22: #{tpu_custom_call.1} parent=1 // pred_check
      _
    $region23: #{tpu_custom_call.1} parent=1 // pred_check_branch
      %135 = sbr.rel (0) target = $region25
    $region24: #{tpu_custom_call.1} parent=1 // pred_region
      %137 = vsyncadd [#allocation3], 0
      %s139 = sshll.u32 [#allocation2], 4
      %s140 = int_to_ptr.vmem [resolvable:$true] %s139
      %s141 = sshll.u32 %s5, 4
      %s142 = int_to_ptr.hbm [resolvable:$true] %s141
      %144 = dma.vmem_to_hbm [thread:$0]  %s140, 128, %s142, [#allocation3]
    $region25: #{tpu_custom_call.1} parent=1 // pred_fallthru
      _
    // Predicated region
    $region26: #{tpu_custom_call.1} parent=1 // pred_check
      _
    $region27: #{tpu_custom_call.1} parent=1 // pred_check_branch
      %146 = sbr.rel (0) target = $region29
    $region28: #{tpu_custom_call.1} parent=1 // pred_region
      %148 = dma.done [#allocation3], 128
    $region29: #{tpu_custom_call.1} parent=1 // pred_fallthru
      _
    %149 = vsyncpa [#allocation3], 1

</llo_original>
